<compile_context>
chip_gen: v5e
topology: v5e:2x2
jax: 0.10.0
libtpu: 0.0.40
codegen_flags: <defaults>
</compile_context>

<pallas_src>
import functools
import math

import jax
import jax.numpy as jnp
from jax import lax
from jax.experimental import pallas as pl
from jax.experimental.pallas import tpu as pltpu


_MASK = 1e30  # f32 additive-mask magnitude; never cast to bf16


def _round_up(n, m):
    return ((n + m - 1) // m) * m


def _tconv(x, w_bf16, b_f32, d_qk, d_v, neg_bias, row_gate):
    """One TransformerConv (heads=1) on VMEM-resident values; returns f32.

    Packed weight layout is [ V | skip | Q | K ] (wide blocks first so padded
    V/skip slices stay 128-aligned).  The 1/sqrt(d) scale is pre-folded into
    the Q columns, so no score scaling happens here.
    """
    proj = jnp.dot(x.astype(jnp.bfloat16), w_bf16,
                   preferred_element_type=jnp.float32) + b_f32
    v = proj[:, 0 * d_v:1 * d_v]
    skip = proj[:, 1 * d_v:2 * d_v]
    q = proj[:, 2 * d_v:2 * d_v + d_qk]
    k = proj[:, 2 * d_v + d_qk:2 * d_v + 2 * d_qk]

    # scores[i, j] = <Q_i, K_j> / sqrt(d) (scale folded into Wq/bq). Contract on
    # K's last dim so no explicit k.T is materialized.
    # TODO(synk): check via pl.lower_as_mlir that this does not emit a hidden
    # vxpose of K; if it does, emit K^T once from the packed projection instead.
    scores = lax.dot_general(
        q.astype(jnp.bfloat16), k.astype(jnp.bfloat16),
        dimension_numbers=(((1,), (1,)), ((), ())),
        preferred_element_type=jnp.float32)

    # Masked softmax over incoming edges (axis=-1 == source nodes). The f32
    # -1e30 bias makes exp() underflow to exactly 0 on non-edges whenever the
    # row has at least one edge -> no [N,N] select needed.
    masked = scores + neg_bias
    m = jnp.max(masked, axis=-1, keepdims=True)
    p = jnp.exp(masked - m)
    attn = p * pl.reciprocal(jnp.sum(p, axis=-1, keepdims=True), approx=True)

    agg = jnp.dot(attn.astype(jnp.bfloat16), v.astype(jnp.bfloat16),
                  preferred_element_type=jnp.float32)
    # Zero in-degree rows fall back to out = skip (PyG semantics): [N,1] gate.
    return skip + agg * row_gate


def _fused_gt_kernel(x_ref, adj_ref, w1_ref, b1_ref, w2_ref, b2_ref,
                     w3_ref, b3_ref, o_ref, *, d1, d2, d3, d3_pad):
    # Additive mask bias derived ONCE from the int8 adjacency, reused 3x.
    adjf = adj_ref[...].astype(jnp.float32)          # 0 / 1
    neg_bias = (adjf - 1.0) * _MASK                  # 0 on edges, -1e30 off edges
    # [N,1] f32 gate: 1 iff the row has at least one incoming edge.
    row_gate = (jnp.max(neg_bias, axis=-1, keepdims=True) >= -0.5).astype(
        jnp.float32)

    x = x_ref[...]                                   # already bf16
    h = _tconv(x, w1_ref[...], b1_ref[...], d1, d1, neg_bias, row_gate)
    h = jnp.maximum(h, 0.0)                          # relu
    # TODO(synk): F.dropout skipped (identity under training=False / eval mode).
    h = _tconv(h, w2_ref[...], b2_ref[...], d2, d2, neg_bias, row_gate)
    h = jnp.maximum(h, 0.0)                          # relu
    out = _tconv(h, w3_ref[...], b3_ref[...], d3, d3_pad, neg_bias, row_gate)

    # log_softmax(dim=1) over the true d3 columns (padded lanes are exact zeros
    # from the zero-padded V/skip weights); store a single unmasked, lane-dense
    # [N, d3_pad] slab with 0 in the padding.
    col = lax.broadcasted_iota(jnp.int32, out.shape, 1)
    valid = col < d3
    mx = jnp.max(jnp.where(valid, out, -_MASK), axis=-1, keepdims=True)
    z = out - mx
    ez = jnp.exp(jnp.where(valid, z, -_MASK))        # exp(-1e30) == 0 exactly
    lse = jnp.log(jnp.sum(ez, axis=-1, keepdims=True))
    o_ref[...] = jnp.where(valid, z - lse, 0.0).astype(o_ref.dtype)


def _full_spec(shape):
    return pl.BlockSpec(shape, lambda *_: (0,) * len(shape))


def _pack_layer(p, pad_v_to=None):
    """Pack 4 projections into one bf16 weight and one f32 bias.

    Layout [ V | skip | Q | K ]; 1/sqrt(d) folded into Q; optionally zero-pad
    the V/skip column blocks to `pad_v_to` (for a lane-dense output store).
    """
    d = p["wq"].shape[1]
    scale = 1.0 / math.sqrt(d)
    wq, bq = p["wq"] * scale, p["bq"] * scale
    wk, bk = p["wk"], p["bk"]
    wv, bv = p["wv"], p["bv"]
    ws, bs = p["ws"], p["bs"]
    if pad_v_to is not None and pad_v_to > d:
        padw = ((0, 0), (0, pad_v_to - d))
        wv, ws = jnp.pad(wv, padw), jnp.pad(ws, padw)
        bv, bs = jnp.pad(bv, padw), jnp.pad(bs, padw)
    w = jnp.concatenate([wv, ws, wq, wk], axis=1).astype(jnp.bfloat16)
    b = jnp.concatenate([bv, bs, bq, bk], axis=1).astype(jnp.float32)
    return w, b


def pack_params(params):
    """Pack/quantize weights ONCE (call outside the per-step jitted forward)."""
    d1 = params["layer1"]["wq"].shape[1]
    d2 = params["layer2"]["wq"].shape[1]
    d3 = params["layer3"]["wq"].shape[1]
    d3_pad = _round_up(d3, 128)
    w1, b1 = _pack_layer(params["layer1"])
    w2, b2 = _pack_layer(params["layer2"])
    w3, b3 = _pack_layer(params["layer3"], pad_v_to=d3_pad)
    packed = {"w1": w1, "b1": b1, "w2": w2, "b2": b2, "w3": w3, "b3": b3}
    return packed, (d1, d2, d3, d3_pad)


def build_adjacency(edge_index, num_nodes):
    """Densify the (static) edge list ONCE into int8 adj[dst, src] = 1."""
    return (jnp.zeros((num_nodes, num_nodes), jnp.int8)
            .at[edge_index[1], edge_index[0]].set(1))


@functools.partial(jax.jit, static_argnames=("dims",))
def graph_transformer_forward(x, adj, packed, dims):
    """Eval-mode forward of GraphTransformer as ONE fused Pallas call."""
    d1, d2, d3, d3_pad = dims
    N = x.shape[0]
    x = x.astype(jnp.bfloat16)   # layer-1 matmul runs bf16 anyway; halves x DMA

    kernel = functools.partial(_fused_gt_kernel, d1=d1, d2=d2, d3=d3,
                               d3_pad=d3_pad)
    in_arrays = (x, adj, packed["w1"], packed["b1"], packed["w2"],
                 packed["b2"], packed["w3"], packed["b3"])
    in_specs = [_full_spec(a.shape) for a in in_arrays]

    # TODO(synk): for non-toy N, replace grid=(1,) with dst-row tiles
    # ("parallel", split across v7x's 2 TensorCores) x src-col tiles
    # ("arbitrary") using a flash-style online softmax with VMEM scratch so
    # scores/adj tiles are only [tq, tk]; and/or batch many graphs along a
    # leading "parallel" grid axis to amortize the ~0.35us/step overhead.
    out_pad = pl.pallas_call(
        kernel,
        grid=(1,),
        in_specs=in_specs,
        out_specs=_full_spec((N, d3_pad)),
        out_shape=jax.ShapeDtypeStruct((N, d3_pad), jnp.float32),
        compiler_params=pltpu.CompilerParams(
            dimension_semantics=("arbitrary",),
            vmem_limit_bytes=32 * 1024 * 1024),
    )(*in_arrays)
    # Slice off the lane padding in the wrapper (store itself stays lane-dense).
    return out_pad[:, :d3]


def init_layer_params(key, d_in, d_out):
    ks = jax.random.split(key, 8)
    s_in = 1.0 / math.sqrt(d_in)

    def lin_w(k):
        return jax.random.normal(k, (d_in, d_out), jnp.float32) * s_in

    def lin_b(k):
        return jax.random.normal(k, (1, d_out), jnp.float32) * 0.01

    return {
        "wq": lin_w(ks[0]), "bq": lin_b(ks[1]),
        "wk": lin_w(ks[2]), "bk": lin_b(ks[3]),
        "wv": lin_w(ks[4]), "bv": lin_b(ks[5]),
        "ws": lin_w(ks[6]), "bs": lin_b(ks[7]),
    }


if __name__ == "__main__":
    N = 16            # number of graph nodes
    INPUT_SIZE = 8
    HIDDEN_SIZE = 32
    OUTPUT_SIZE = 8

    root = jax.random.PRNGKey(0)
    k_x, k1, k2, k3 = jax.random.split(root, 4)

    # node features
    x = jax.random.normal(k_x, (N, INPUT_SIZE), jnp.float32)

    # deterministic bidirectional ring graph: edges i<->(i+1) mod N
    src = jnp.concatenate([jnp.arange(N), (jnp.arange(N) + 1) % N])
    dst = jnp.concatenate([(jnp.arange(N) + 1) % N, jnp.arange(N)])
    edge_index = jnp.stack([src, dst], axis=0).astype(jnp.int32)  # [2, 2N]

    params = {
        "layer1": init_layer_params(k1, INPUT_SIZE, HIDDEN_SIZE),
        "layer2": init_layer_params(k2, HIDDEN_SIZE, HIDDEN_SIZE),
        "layer3": init_layer_params(k3, HIDDEN_SIZE, OUTPUT_SIZE),
    }

    # Static-graph / static-weight preprocessing done ONCE, outside the
    # jitted per-call forward (no per-call O(N^2) scatter, no repacking).
    adj = build_adjacency(edge_index, N)     # int8 [N, N]
    packed, dims = pack_params(params)

    out = graph_transformer_forward(x, adj, packed, dims=dims)
    out = jax.block_until_ready(out)

    assert out.shape == (N, OUTPUT_SIZE)
    assert bool(jnp.all(jnp.isfinite(out)))
    # rows of log_softmax should sum (in prob space) to ~1
    assert bool(jnp.allclose(jnp.sum(jnp.exp(out), axis=1), 1.0, atol=1e-4))

    print("KERNEL_OK")
</pallas_src>

<mosaic_0001>
module attributes {stable_mosaic.version = 11 : i64} {
  func.func @_fused_gt_kernel(%arg0: i32, %arg1: memref<16x8xbf16, #tpu.memory_space<vmem>>, %arg2: memref<16x16xi8, #tpu.memory_space<vmem>>, %arg3: memref<8x128xbf16, #tpu.memory_space<vmem>>, %arg4: memref<1x128xf32, #tpu.memory_space<vmem>>, %arg5: memref<32x128xbf16, #tpu.memory_space<vmem>>, %arg6: memref<1x128xf32, #tpu.memory_space<vmem>>, %arg7: memref<32x272xbf16, #tpu.memory_space<vmem>>, %arg8: memref<1x272xf32, #tpu.memory_space<vmem>>, %arg9: memref<16x128xf32, #tpu.memory_space<vmem>>) attributes {dimension_semantics = [#tpu.dimension_semantics<arbitrary>], iteration_bounds = array<i64: 1>, scalar_prefetch = 0 : i64, scratch_operands = 0 : i64, tpu.core_type = #tpu.core_type<tc>, window_params = [{pipeline_mode = #tpu.pipeline_mode<synchronous>, transform_indices = @transform_0, window_bounds = array<i64: 16, 8>}, {pipeline_mode = #tpu.pipeline_mode<synchronous>, transform_indices = @transform_1, window_bounds = array<i64: 16, 16>}, {pipeline_mode = #tpu.pipeline_mode<synchronous>, transform_indices = @transform_2, window_bounds = array<i64: 8, 128>}, {pipeline_mode = #tpu.pipeline_mode<synchronous>, transform_indices = @transform_3, window_bounds = array<i64: 1, 128>}, {pipeline_mode = #tpu.pipeline_mode<synchronous>, transform_indices = @transform_4, window_bounds = array<i64: 32, 128>}, {pipeline_mode = #tpu.pipeline_mode<synchronous>, transform_indices = @transform_5, window_bounds = array<i64: 1, 128>}, {pipeline_mode = #tpu.pipeline_mode<synchronous>, transform_indices = @transform_6, window_bounds = array<i64: 32, 272>}, {pipeline_mode = #tpu.pipeline_mode<synchronous>, transform_indices = @transform_7, window_bounds = array<i64: 1, 272>}, {pipeline_mode = #tpu.pipeline_mode<synchronous>, transform_indices = @transform_8, window_bounds = array<i64: 16, 128>}]} {
    %c0 = arith.constant 0 : index
    %c0_0 = arith.constant 0 : index
    %0 = vector.load %arg2[%c0, %c0_0] : memref<16x16xi8, #tpu.memory_space<vmem>>, vector<16x16xi8>
    %1 = arith.sitofp %0 : vector<16x16xi8> to vector<16x16xf32>
    %cst = arith.constant 1.000000e+00 : f32
    %2 = vector.broadcast %cst : f32 to vector<16x16xf32>
    %3 = arith.subf %1, %2 : vector<16x16xf32>
    %cst_1 = arith.constant 1.000000e+30 : f32
    %4 = vector.broadcast %cst_1 : f32 to vector<16x16xf32>
    %5 = arith.mulf %3, %4 : vector<16x16xf32>
    %cst_2 = arith.constant dense<0xFF800000> : vector<16xf32>
    %6 = vector.multi_reduction <maximumf>, %5, %cst_2 [1] : vector<16x16xf32> to vector<16xf32>
    %7 = vector.shape_cast %6 : vector<16xf32> to vector<16x1xf32>
    %cst_3 = arith.constant -5.000000e-01 : f32
    %8 = vector.broadcast %cst_3 : f32 to vector<16x1xf32>
    %9 = arith.cmpf oge, %7, %8 : vector<16x1xf32>
    %10 = arith.extui %9 : vector<16x1xi1> to vector<16x1xi32>
    %11 = arith.sitofp %10 : vector<16x1xi32> to vector<16x1xf32>
    %c0_4 = arith.constant 0 : index
    %c0_5 = arith.constant 0 : index
    %12 = vector.load %arg1[%c0_4, %c0_5] : memref<16x8xbf16, #tpu.memory_space<vmem>>, vector<16x8xbf16>
    %c0_6 = arith.constant 0 : index
    %c0_7 = arith.constant 0 : index
    %13 = vector.load %arg3[%c0_6, %c0_7] : memref<8x128xbf16, #tpu.memory_space<vmem>>, vector<8x128xbf16>
    %c0_8 = arith.constant 0 : index
    %c0_9 = arith.constant 0 : index
    %14 = vector.load %arg4[%c0_8, %c0_9] : memref<1x128xf32, #tpu.memory_space<vmem>>, vector<1x128xf32>
    %cst_10 = arith.constant dense<0.000000e+00> : vector<16x128xf32>
    %15 = tpu.matmul %12, %13, %cst_10 {dimension_numbers = #tpu.dot_dimension_numbers<[1], [0], [0], [1], [0, 0, 1, 1], [], []>} : vector<16x8xbf16>, vector<8x128xbf16>, vector<16x128xf32> -> vector<16x128xf32>
    %16 = vector.broadcast %14 : vector<1x128xf32> to vector<16x128xf32>
    %17 = arith.addf %15, %16 : vector<16x128xf32>
    %18 = vector.extract_strided_slice %17 {offsets = [0, 0], sizes = [16, 32], strides = [1, 1]} : vector<16x128xf32> to vector<16x32xf32>
    %19 = vector.extract_strided_slice %17 {offsets = [0, 32], sizes = [16, 32], strides = [1, 1]} : vector<16x128xf32> to vector<16x32xf32>
    %20 = vector.extract_strided_slice %17 {offsets = [0, 64], sizes = [16, 32], strides = [1, 1]} : vector<16x128xf32> to vector<16x32xf32>
    %21 = vector.extract_strided_slice %17 {offsets = [0, 96], sizes = [16, 32], strides = [1, 1]} : vector<16x128xf32> to vector<16x32xf32>
    %22 = arith.truncf %20 : vector<16x32xf32> to vector<16x32xbf16>
    %23 = arith.truncf %21 : vector<16x32xf32> to vector<16x32xbf16>
    %cst_11 = arith.constant dense<0.000000e+00> : vector<16x16xf32>
    %24 = tpu.matmul %22, %23, %cst_11 {dimension_numbers = #tpu.dot_dimension_numbers<[1], [1], [0], [0], [0, 0, 1, 0], [], []>} : vector<16x32xbf16>, vector<16x32xbf16>, vector<16x16xf32> -> vector<16x16xf32>
    %25 = arith.addf %24, %5 : vector<16x16xf32>
    %cst_12 = arith.constant dense<0xFF800000> : vector<16xf32>
    %26 = vector.multi_reduction <maximumf>, %25, %cst_12 [1] : vector<16x16xf32> to vector<16xf32>
    %27 = vector.shape_cast %26 : vector<16xf32> to vector<16x1xf32>
    %28 = vector.broadcast %27 : vector<16x1xf32> to vector<16x16xf32>
    %29 = arith.subf %25, %28 : vector<16x16xf32>
    %30 = math.exp %29 : vector<16x16xf32>
    %cst_13 = arith.constant dense<0.000000e+00> : vector<16xf32>
    %31 = vector.multi_reduction <add>, %30, %cst_13 [1] : vector<16x16xf32> to vector<16xf32>
    %32 = vector.shape_cast %31 : vector<16xf32> to vector<16x1xf32>
    %33 = tpu.reciprocal %32 {approx = true} : vector<16x1xf32> -> vector<16x1xf32>
    %34 = vector.broadcast %33 : vector<16x1xf32> to vector<16x16xf32>
    %35 = arith.mulf %30, %34 : vector<16x16xf32>
    %36 = arith.truncf %35 : vector<16x16xf32> to vector<16x16xbf16>
    %37 = arith.truncf %18 : vector<16x32xf32> to vector<16x32xbf16>
    %cst_14 = arith.constant dense<0.000000e+00> : vector<16x32xf32>
    %38 = tpu.matmul %36, %37, %cst_14 {dimension_numbers = #tpu.dot_dimension_numbers<[1], [0], [0], [1], [0, 0, 1, 1], [], []>} : vector<16x16xbf16>, vector<16x32xbf16>, vector<16x32xf32> -> vector<16x32xf32>
    %39 = vector.broadcast %11 : vector<16x1xf32> to vector<16x32xf32>
    %40 = arith.mulf %38, %39 : vector<16x32xf32>
    %41 = arith.addf %19, %40 : vector<16x32xf32>
    %cst_15 = arith.constant 0.000000e+00 : f32
    %42 = vector.broadcast %cst_15 : f32 to vector<16x32xf32>
    %43 = arith.maximumf %41, %42 : vector<16x32xf32>
    %c0_16 = arith.constant 0 : index
    %c0_17 = arith.constant 0 : index
    %44 = vector.load %arg5[%c0_16, %c0_17] : memref<32x128xbf16, #tpu.memory_space<vmem>>, vector<32x128xbf16>
    %c0_18 = arith.constant 0 : index
    %c0_19 = arith.constant 0 : index
    %45 = vector.load %arg6[%c0_18, %c0_19] : memref<1x128xf32, #tpu.memory_space<vmem>>, vector<1x128xf32>
    %46 = arith.truncf %43 : vector<16x32xf32> to vector<16x32xbf16>
    %cst_20 = arith.constant dense<0.000000e+00> : vector<16x128xf32>
    %47 = tpu.matmul %46, %44, %cst_20 {dimension_numbers = #tpu.dot_dimension_numbers<[1], [0], [0], [1], [0, 0, 1, 1], [], []>} : vector<16x32xbf16>, vector<32x128xbf16>, vector<16x128xf32> -> vector<16x128xf32>
    %48 = vector.broadcast %45 : vector<1x128xf32> to vector<16x128xf32>
    %49 = arith.addf %47, %48 : vector<16x128xf32>
    %50 = vector.extract_strided_slice %49 {offsets = [0, 0], sizes = [16, 32], strides = [1, 1]} : vector<16x128xf32> to vector<16x32xf32>
    %51 = vector.extract_strided_slice %49 {offsets = [0, 32], sizes = [16, 32], strides = [1, 1]} : vector<16x128xf32> to vector<16x32xf32>
    %52 = vector.extract_strided_slice %49 {offsets = [0, 64], sizes = [16, 32], strides = [1, 1]} : vector<16x128xf32> to vector<16x32xf32>
    %53 = vector.extract_strided_slice %49 {offsets = [0, 96], sizes = [16, 32], strides = [1, 1]} : vector<16x128xf32> to vector<16x32xf32>
    %54 = arith.truncf %52 : vector<16x32xf32> to vector<16x32xbf16>
    %55 = arith.truncf %53 : vector<16x32xf32> to vector<16x32xbf16>
    %cst_21 = arith.constant dense<0.000000e+00> : vector<16x16xf32>
    %56 = tpu.matmul %54, %55, %cst_21 {dimension_numbers = #tpu.dot_dimension_numbers<[1], [1], [0], [0], [0, 0, 1, 0], [], []>} : vector<16x32xbf16>, vector<16x32xbf16>, vector<16x16xf32> -> vector<16x16xf32>
    %57 = arith.addf %56, %5 : vector<16x16xf32>
    %cst_22 = arith.constant dense<0xFF800000> : vector<16xf32>
    %58 = vector.multi_reduction <maximumf>, %57, %cst_22 [1] : vector<16x16xf32> to vector<16xf32>
    %59 = vector.shape_cast %58 : vector<16xf32> to vector<16x1xf32>
    %60 = vector.broadcast %59 : vector<16x1xf32> to vector<16x16xf32>
    %61 = arith.subf %57, %60 : vector<16x16xf32>
    %62 = math.exp %61 : vector<16x16xf32>
    %cst_23 = arith.constant dense<0.000000e+00> : vector<16xf32>
    %63 = vector.multi_reduction <add>, %62, %cst_23 [1] : vector<16x16xf32> to vector<16xf32>
    %64 = vector.shape_cast %63 : vector<16xf32> to vector<16x1xf32>
    %65 = tpu.reciprocal %64 {approx = true} : vector<16x1xf32> -> vector<16x1xf32>
    %66 = vector.broadcast %65 : vector<16x1xf32> to vector<16x16xf32>
    %67 = arith.mulf %62, %66 : vector<16x16xf32>
    %68 = arith.truncf %67 : vector<16x16xf32> to vector<16x16xbf16>
    %69 = arith.truncf %50 : vector<16x32xf32> to vector<16x32xbf16>
    %cst_24 = arith.constant dense<0.000000e+00> : vector<16x32xf32>
    %70 = tpu.matmul %68, %69, %cst_24 {dimension_numbers = #tpu.dot_dimension_numbers<[1], [0], [0], [1], [0, 0, 1, 1], [], []>} : vector<16x16xbf16>, vector<16x32xbf16>, vector<16x32xf32> -> vector<16x32xf32>
    %71 = vector.broadcast %11 : vector<16x1xf32> to vector<16x32xf32>
    %72 = arith.mulf %70, %71 : vector<16x32xf32>
    %73 = arith.addf %51, %72 : vector<16x32xf32>
    %cst_25 = arith.constant 0.000000e+00 : f32
    %74 = vector.broadcast %cst_25 : f32 to vector<16x32xf32>
    %75 = arith.maximumf %73, %74 : vector<16x32xf32>
    %c0_26 = arith.constant 0 : index
    %c0_27 = arith.constant 0 : index
    %76 = vector.load %arg7[%c0_26, %c0_27] : memref<32x272xbf16, #tpu.memory_space<vmem>>, vector<32x272xbf16>
    %c0_28 = arith.constant 0 : index
    %c0_29 = arith.constant 0 : index
    %77 = vector.load %arg8[%c0_28, %c0_29] : memref<1x272xf32, #tpu.memory_space<vmem>>, vector<1x272xf32>
    %78 = arith.truncf %75 : vector<16x32xf32> to vector<16x32xbf16>
    %cst_30 = arith.constant dense<0.000000e+00> : vector<16x272xf32>
    %79 = tpu.matmul %78, %76, %cst_30 {dimension_numbers = #tpu.dot_dimension_numbers<[1], [0], [0], [1], [0, 0, 1, 1], [], []>} : vector<16x32xbf16>, vector<32x272xbf16>, vector<16x272xf32> -> vector<16x272xf32>
    %80 = vector.broadcast %77 : vector<1x272xf32> to vector<16x272xf32>
    %81 = arith.addf %79, %80 : vector<16x272xf32>
    %82 = vector.extract_strided_slice %81 {offsets = [0, 0], sizes = [16, 128], strides = [1, 1]} : vector<16x272xf32> to vector<16x128xf32>
    %83 = vector.extract_strided_slice %81 {offsets = [0, 128], sizes = [16, 128], strides = [1, 1]} : vector<16x272xf32> to vector<16x128xf32>
    %84 = vector.extract_strided_slice %81 {offsets = [0, 256], sizes = [16, 8], strides = [1, 1]} : vector<16x272xf32> to vector<16x8xf32>
    %85 = vector.extract_strided_slice %81 {offsets = [0, 264], sizes = [16, 8], strides = [1, 1]} : vector<16x272xf32> to vector<16x8xf32>
    %86 = arith.truncf %84 : vector<16x8xf32> to vector<16x8xbf16>
    %87 = arith.truncf %85 : vector<16x8xf32> to vector<16x8xbf16>
    %cst_31 = arith.constant dense<0.000000e+00> : vector<16x16xf32>
    %88 = tpu.matmul %86, %87, %cst_31 {dimension_numbers = #tpu.dot_dimension_numbers<[1], [1], [0], [0], [0, 0, 1, 0], [], []>} : vector<16x8xbf16>, vector<16x8xbf16>, vector<16x16xf32> -> vector<16x16xf32>
    %89 = arith.addf %88, %5 : vector<16x16xf32>
    %cst_32 = arith.constant dense<0xFF800000> : vector<16xf32>
    %90 = vector.multi_reduction <maximumf>, %89, %cst_32 [1] : vector<16x16xf32> to vector<16xf32>
    %91 = vector.shape_cast %90 : vector<16xf32> to vector<16x1xf32>
    %92 = vector.broadcast %91 : vector<16x1xf32> to vector<16x16xf32>
    %93 = arith.subf %89, %92 : vector<16x16xf32>
    %94 = math.exp %93 : vector<16x16xf32>
    %cst_33 = arith.constant dense<0.000000e+00> : vector<16xf32>
    %95 = vector.multi_reduction <add>, %94, %cst_33 [1] : vector<16x16xf32> to vector<16xf32>
    %96 = vector.shape_cast %95 : vector<16xf32> to vector<16x1xf32>
    %97 = tpu.reciprocal %96 {approx = true} : vector<16x1xf32> -> vector<16x1xf32>
    %98 = vector.broadcast %97 : vector<16x1xf32> to vector<16x16xf32>
    %99 = arith.mulf %94, %98 : vector<16x16xf32>
    %100 = arith.truncf %99 : vector<16x16xf32> to vector<16x16xbf16>
    %101 = arith.truncf %82 : vector<16x128xf32> to vector<16x128xbf16>
    %cst_34 = arith.constant dense<0.000000e+00> : vector<16x128xf32>
    %102 = tpu.matmul %100, %101, %cst_34 {dimension_numbers = #tpu.dot_dimension_numbers<[1], [0], [0], [1], [0, 0, 1, 1], [], []>} : vector<16x16xbf16>, vector<16x128xbf16>, vector<16x128xf32> -> vector<16x128xf32>
    %103 = vector.broadcast %11 : vector<16x1xf32> to vector<16x128xf32>
    %104 = arith.mulf %102, %103 : vector<16x128xf32>
    %105 = arith.addf %83, %104 : vector<16x128xf32>
    %106 = tpu.iota {dimensions = array<i32: 1>} : vector<16x128xi32>
    %c8_i32 = arith.constant 8 : i32
    %107 = vector.broadcast %c8_i32 : i32 to vector<16x128xi32>
    %108 = arith.cmpi slt, %106, %107 : vector<16x128xi32>
    %cst_35 = arith.constant -1.000000e+30 : f32
    %109 = vector.broadcast %cst_35 : f32 to vector<16x128xf32>
    %110 = arith.select %108, %105, %109 : vector<16x128xi1>, vector<16x128xf32>
    %cst_36 = arith.constant dense<0xFF800000> : vector<16xf32>
    %111 = vector.multi_reduction <maximumf>, %110, %cst_36 [1] : vector<16x128xf32> to vector<16xf32>
    %112 = vector.shape_cast %111 : vector<16xf32> to vector<16x1xf32>
    %113 = vector.broadcast %112 : vector<16x1xf32> to vector<16x128xf32>
    %114 = arith.subf %105, %113 : vector<16x128xf32>
    %cst_37 = arith.constant -1.000000e+30 : f32
    %115 = vector.broadcast %cst_37 : f32 to vector<16x128xf32>
    %116 = arith.select %108, %114, %115 : vector<16x128xi1>, vector<16x128xf32>
    %117 = math.exp %116 : vector<16x128xf32>
    %cst_38 = arith.constant dense<0.000000e+00> : vector<16xf32>
    %118 = vector.multi_reduction <add>, %117, %cst_38 [1] : vector<16x128xf32> to vector<16xf32>
    %119 = vector.shape_cast %118 : vector<16xf32> to vector<16x1xf32>
    %120 = math.log %119 : vector<16x1xf32>
    %121 = vector.broadcast %120 : vector<16x1xf32> to vector<16x128xf32>
    %122 = arith.subf %114, %121 : vector<16x128xf32>
    %cst_39 = arith.constant 0.000000e+00 : f32
    %123 = vector.broadcast %cst_39 : f32 to vector<16x128xf32>
    %124 = arith.select %108, %122, %123 : vector<16x128xi1>, vector<16x128xf32>
    %c0_40 = arith.constant 0 : index
    %c0_41 = arith.constant 0 : index
    %125 = vector.load %arg9[%c0_40, %c0_41] : memref<16x128xf32, #tpu.memory_space<vmem>>, vector<16x128xf32>
    tpu.vector_store %arg9[%c0_40, %c0_41], %124 {strides = array<i32>} : memref<16x128xf32, #tpu.memory_space<vmem>>, vector<16x128xf32>,
    return
  }
  func.func @transform_0(%arg0: i32) -> (i32, i32) {
    %c0_i32 = arith.constant 0 : i32
    %c0_i32_0 = arith.constant 0 : i32
    %c0_i32_1 = arith.constant 0 : i32
    return %c0_i32, %c0_i32_0 : i32, i32
  }
  func.func @transform_1(%arg0: i32) -> (i32, i32) {
    %c0_i32 = arith.constant 0 : i32
    %c0_i32_0 = arith.constant 0 : i32
    %c0_i32_1 = arith.constant 0 : i32
    return %c0_i32, %c0_i32_0 : i32, i32
  }
  func.func @transform_2(%arg0: i32) -> (i32, i32) {
    %c0_i32 = arith.constant 0 : i32
    %c0_i32_0 = arith.constant 0 : i32
    %c0_i32_1 = arith.constant 0 : i32
    return %c0_i32, %c0_i32_0 : i32, i32
  }
  func.func @transform_3(%arg0: i32) -> (i32, i32) {
    %c0_i32 = arith.constant 0 : i32
    %c0_i32_0 = arith.constant 0 : i32
    %c0_i32_1 = arith.constant 0 : i32
    return %c0_i32, %c0_i32_0 : i32, i32
  }
  func.func @transform_4(%arg0: i32) -> (i32, i32) {
    %c0_i32 = arith.constant 0 : i32
    %c0_i32_0 = arith.constant 0 : i32
    %c0_i32_1 = arith.constant 0 : i32
    return %c0_i32, %c0_i32_0 : i32, i32
  }
  func.func @transform_5(%arg0: i32) -> (i32, i32) {
    %c0_i32 = arith.constant 0 : i32
    %c0_i32_0 = arith.constant 0 : i32
    %c0_i32_1 = arith.constant 0 : i32
    return %c0_i32, %c0_i32_0 : i32, i32
  }
  func.func @transform_6(%arg0: i32) -> (i32, i32) {
    %c0_i32 = arith.constant 0 : i32
    %c0_i32_0 = arith.constant 0 : i32
    %c0_i32_1 = arith.constant 0 : i32
    return %c0_i32, %c0_i32_0 : i32, i32
  }
  func.func @transform_7(%arg0: i32) -> (i32, i32) {
    %c0_i32 = arith.constant 0 : i32
    %c0_i32_0 = arith.constant 0 : i32
    %c0_i32_1 = arith.constant 0 : i32
    return %c0_i32, %c0_i32_0 : i32, i32
  }
  func.func @transform_8(%arg0: i32) -> (i32, i32) {
    %c0_i32 = arith.constant 0 : i32
    %c0_i32_0 = arith.constant 0 : i32
    %c0_i32_1 = arith.constant 0 : i32
    return %c0_i32, %c0_i32_0 : i32, i32
  }
}

</mosaic_0001>

<llo_original>
// kernel: graph_transformer_forward.1
$region0: #{graph_transformer_forward.1}
  #allocation0 [shape = 'u32[]', space=smem, size = 0x4, offset = 0x4, fixed_abs, tag = 'smem constant byte address 0x4 - core index']
  #allocation1 [shape = 'u32[72,128]{1,0:T(1,128)}', space=vmem, size = 0x9000, scoped, tag = 'internal scratch']
  %s0 = inlined_call_operand.vmem [shape: bf16[16,8], index: 0, kind: input, shape index: {}]
  %s1 = inlined_call_operand.vmem [shape: s8[16,16], index: 1, kind: input, shape index: {}]
  %s2 = inlined_call_operand.vmem [shape: bf16[8,128], index: 2, kind: input, shape index: {}]
  %s3 = inlined_call_operand.vmem [shape: f32[1,128], index: 3, kind: input, shape index: {}]
  %s4 = inlined_call_operand.vmem [shape: bf16[32,128], index: 4, kind: input, shape index: {}]
  %s5 = inlined_call_operand.vmem [shape: f32[1,128], index: 5, kind: input, shape index: {}]
  %s6 = inlined_call_operand.hbm [shape: bf16[32,272], index: 6, kind: input, shape index: {}]
  %s7 = inlined_call_operand.vmem [shape: f32[1,272], index: 7, kind: input, shape index: {}]
  %s8 = inlined_call_operand.vmem [shape: f32[16,128], index: 8, kind: output, shape index: {}]
  %s9 = sld [smem:[#allocation0]]
  $region46: #{graph_transformer_forward.1} parent=0
    _
  %s11 = ssub.s32 1, %s9
  %s12 = scalar_select 0, %s11, %s9
  $region1: #{graph_transformer_forward.1} parent=0
    #allocation2 [shape = 'u8[24576]{0}', space=vmem, size = 0x6000, scoped, tag = 'input window, operand 6, single buffered']
    #allocation3 [shape = 's32[1]{0}', space=sflag, size = 0x4, scoped, tag = 'scoped memory for graph_transformer_forward.1']
    %13 = vsyncpa [#allocation3], 0
    // Predicated region
    $region2: #{graph_transformer_forward.1} parent=1 // pred_check
      _
    $region3: #{graph_transformer_forward.1} parent=1 // pred_check_branch
      %15 = sbr.rel (0) target = $region5
    $region4: #{graph_transformer_forward.1} parent=1 // pred_region
      _
    $region5: #{graph_transformer_forward.1} parent=1 // pred_fallthru
      _
    // Predicated region
    $region6: #{graph_transformer_forward.1} parent=1 // pred_check
      _
    $region7: #{graph_transformer_forward.1} parent=1 // pred_check_branch
      %17 = sbr.rel (0) target = $region9
    $region8: #{graph_transformer_forward.1} parent=1 // pred_region
      _
    $region9: #{graph_transformer_forward.1} parent=1 // pred_fallthru
      _
    // Predicated region
    $region10: #{graph_transformer_forward.1} parent=1 // pred_check
      _
    $region11: #{graph_transformer_forward.1} parent=1 // pred_check_branch
      %19 = sbr.rel (0) target = $region13
    $region12: #{graph_transformer_forward.1} parent=1 // pred_region
      _
    $region13: #{graph_transformer_forward.1} parent=1 // pred_fallthru
      _
    // Predicated region
    $region14: #{graph_transformer_forward.1} parent=1 // pred_check
      _
    $region15: #{graph_transformer_forward.1} parent=1 // pred_check_branch
      %21 = sbr.rel (0) target = $region17
    $region16: #{graph_transformer_forward.1} parent=1 // pred_region
      _
    $region17: #{graph_transformer_forward.1} parent=1 // pred_fallthru
      _
    // Predicated region
    $region18: #{graph_transformer_forward.1} parent=1 // pred_check
      _
    $region19: #{graph_transformer_forward.1} parent=1 // pred_check_branch
      %23 = sbr.rel (0) target = $region21
    $region20: #{graph_transformer_forward.1} parent=1 // pred_region
      _
    $region21: #{graph_transformer_forward.1} parent=1 // pred_fallthru
      _
    // Predicated region
    $region22: #{graph_transformer_forward.1} parent=1 // pred_check
      _
    $region23: #{graph_transformer_forward.1} parent=1 // pred_check_branch
      %25 = sbr.rel (0) target = $region25
    $region24: #{graph_transformer_forward.1} parent=1 // pred_region
      _
    $region25: #{graph_transformer_forward.1} parent=1 // pred_fallthru
      _
    // Predicated region
    $region26: #{graph_transformer_forward.1} parent=1 // pred_check
      _
    $region27: #{graph_transformer_forward.1} parent=1 // pred_check_branch
      %27 = sbr.rel (0) target = $region29
    $region28: #{graph_transformer_forward.1} parent=1 // pred_region
      %29 = vsyncadd [#allocation3], 0
      %s30 = sshll.u32 %s6, 4
      %s31 = int_to_ptr.hbm [resolvable:$true] %s30
      %s32 = sshll.u32 [#allocation2], 4
      %s33 = int_to_ptr.vmem [resolvable:$true] %s32
      %38 = dma.hbm_to_vmem [thread:$0]  %s31, 768, %s33, [#allocation3], 192, 192, 12
    $region29: #{graph_transformer_forward.1} parent=1 // pred_fallthru
      _
    // Predicated region
    $region30: #{graph_transformer_forward.1} parent=1 // pred_check
      _
    $region31: #{graph_transformer_forward.1} parent=1 // pred_check_branch
      %40 = sbr.rel (0) target = $region33
    $region32: #{graph_transformer_forward.1} parent=1 // pred_region
      _
    $region33: #{graph_transformer_forward.1} parent=1 // pred_fallthru
      _
    // Predicated region
    $region34: #{graph_transformer_forward.1} parent=1 // pred_check
      _
    $region35: #{graph_transformer_forward.1} parent=1 // pred_check_branch
      %42 = sbr.rel (0) target = $region37
    $region36: #{graph_transformer_forward.1} parent=1 // pred_region
      %44 = dma.done [#allocation3], 768
    $region37: #{graph_transformer_forward.1} parent=1 // pred_fallthru
      _
    %v46 = vld [vmem:[%s1] sm:$0x3]
    %v47 = vld [vmem:[%s1 + $0x2] sm:$0x3]
    %v48 = vunpack.c.0.s8 %v46
    %v49 = vunpack.c.0.s8 %v47
    %v50 = vcvt.s32.f32 %v48
    %v51 = vcvt.s32.f32 %v49
    %v52 = vsub.f32 %v50, 1.0
    %v53 = vsub.f32 %v51, 1.0
    %v54 = vmul.f32 %v52, 1e+30
    %v55 = vmul.f32 %v53, 1e+30
    %vm56 = vcmask 130048
    %v57 = vsel %vm56, %v54, -inf
    %58 = vmax.xlane.f32.xlu0 %v57
    %v59 = vpop.xlane.xlu0 %58
    %v60 = vsel %vm56, %v55, -inf
    %61 = vmax.xlane.f32.xlu0 %v60
    %v62 = vpop.xlane.xlu0 %61
    %vm63 = vcmp.ge.f32.partialorder %v59, -0.5
    %vm64 = vcmp.ge.f32.partialorder %v62, -0.5
    %v65 = vsel %vm63, 1, 0
    %v66 = vsel %vm64, 1, 0
    %v67 = vcvt.s32.f32 %v65
    %v68 = vcvt.s32.f32 %v66
    %v69 = vld [vmem:[%s0] sm:$0xf]
    %v70 = vld [vmem:[%s0 + $0x4] sm:$0xf]
    %v71 = vld [vmem:[%s2] sm:$0xf]
    %v72 = vld [vmem:[%s3] sm:$0x1]
    %v74 = vperm.slane %v72, 0
    %v78 = vunpack.c.l.b16 %v69
    %v79 = vunpack.c.l.b16 %v70
    %v80 = vpack.c.b16 %v79, %v78
    %vm81 = vcmask 64512
    %v83 = vsel %vm81, %v80, 0
    %vm85 = vcmask 1043456
    %v87 = vsel %vm85, %v71, 0
    %89 = vmatpush.bf16.msra.mxu0 0
    %90 = vmatpush.bf16.msra.mxu0 0
    %91 = vmatpush.bf16.msra.mxu0 0
    %92 = vmatpush.bf16.msra.mxu0 0
    %93 = vmatpush.bf16.msra.mxu0 0
    %94 = vmatpush.bf16.msra.mxu0 0
    %95 = vmatpush.bf16.msra.mxu0 0
    %96 = vmatpush.bf16.msra.mxu0 %v87
    %97 = vmatmul.bf16.gmra.mxu0 %v83
    %v98 = vpop.f32.mrf.mxu0
    %v99 = vadd.f32 %v74, %v98
    %v100 = vpop.f32.mrf.mxu0
    %v101 = vadd.f32 %v74, %v100
    %102 = vdwg.mxu0
    %v103 = vpack.c.bf16 %v101, %v99
    %105 = vrot.lane.b32.xlu0 %v103, 64
    %v106 = vpop.permute.xlu0 %105
    %107 = vrot.lane.b32.xlu0 %v103, 32
    %v108 = vpop.permute.xlu0 %107
    %vm109 = vcmask 261120
    %v111 = vsel %vm109, %v106, 0
    %v114 = vsel %vm109, %v108, 0
    %116 = vmatpush.bf16.xpose.msra.mxu0 0
    %117 = vmatpush.bf16.xpose.msra.mxu0 0
    %118 = vmatpush.bf16.xpose.msra.mxu0 0
    %119 = vmatpush.bf16.xpose.msra.mxu0 0
    %120 = vmatpush.bf16.xpose.msra.mxu0 0
    %121 = vmatpush.bf16.xpose.msra.mxu0 0
    %122 = vmatpush.bf16.xpose.msra.mxu0 0
    %123 = vmatpush.bf16.xpose.msra.mxu0 %v114
    %124 = vmatmul.bf16.gmra.mxu0 %v111
    %v125 = vpop.f32.mrf.mxu0
    %v126 = vadd.f32 %v54, %v125
    %v127 = vpop.f32.mrf.mxu0
    %v128 = vadd.f32 %v55, %v127
    %129 = vdwg.mxu0
    %v130 = vsel %vm56, %v126, -inf
    %131 = vmax.xlane.f32.xlu0 %v130
    %v132 = vpop.xlane.xlu0 %131
    %v133 = vsel %vm56, %v128, -inf
    %134 = vmax.xlane.f32.xlu0 %v133
    %v135 = vpop.xlane.xlu0 %134
    %v136 = vsub.f32 %v126, %v132
    %v137 = vsub.f32 %v128, %v135
    %v138 = vmul.f32 %v136, 1.442695
    %v139 = vpow.pop %v138
    %v140 = vmul.f32 %v137, 1.442695
    %v141 = vpow.pop %v140
    %v142 = vsel %vm56, %v139, 0.0
    %143 = vadd.xlane.f32.xlu0 %v142
    %v144 = vpop.xlane.xlu0 %143
    %v145 = vsel %vm56, %v141, 0.0
    %146 = vadd.xlane.f32.xlu0 %v145
    %v147 = vpop.xlane.xlu0 %146
    %v148 = vrcp.pop %v144
    %v149 = vrcp.pop %v147
    %v150 = vmul.f32 %v139, %v148
    %v151 = vmul.f32 %v141, %v149
    %v152 = vpack.c.bf16 %v151, %v150
    %v154 = vsel %vm56, %v152, 0
    %156 = vmatpush.bf16.msra.mxu0 0
    %157 = vmatpush.bf16.msra.mxu0 0
    %158 = vmatpush.bf16.msra.mxu0 0
    %159 = vmatpush.bf16.msra.mxu0 0
    %160 = vmatpush.bf16.msra.mxu0 0
    %161 = vmatpush.bf16.msra.mxu0 0
    %162 = vmatpush.bf16.msra.mxu0 0
    %163 = vmatpush.bf16.msra.mxu0 %v103
    %164 = vmatmul.bf16.gmra.mxu0 %v154
    %v165 = vpop.f32.mrf.mxu0
    %v166 = vadd.f32 0.0, %v165
    %v167 = vpop.f32.mrf.mxu0
    %v168 = vadd.f32 0.0, %v167
    %169 = vdwg.mxu0
    %v170 = vmul.f32 %v166, %v67
    %v171 = vmul.f32 %v168, %v68
    %174 = vrot.lane.b32.xlu0 %v170, 32
    %v175 = vpop.permute.xlu0 %174
    %176 = vrot.lane.b32.xlu0 %v171, 32
    %v177 = vpop.permute.xlu0 %176
    %v180 = vadd.f32 %v99, %v175
    %v181 = vadd.f32 %v101, %v177
    %v182 = vmax.f32 %v180, 0.0
    %v183 = vmax.f32 %v181, 0.0
    %v184 = vld [vmem:[%s4] sm:$0xf]
    %v185 = vld [vmem:[%s4 + $0x4] sm:$0xf]
    %v186 = vld [vmem:[%s4 + $0x8] sm:$0xf]
    %v187 = vld [vmem:[%s4 + $0xc] sm:$0xf]
    %v188 = vld [vmem:[%s5] sm:$0x1]
    %v189 = vpack.c.bf16 %v183, %v182
    %v191 = vperm.slane %v188, 0
    %194 = vrot.lane.b32.xlu0 %v189, 96
    %v195 = vpop.permute.xlu0 %194
    %v200 = vunpack.c.l.b16 %v184
    %v201 = vunpack.c.l.b16 %v185
    %v202 = vunpack.c.l.b16 %v186
    %v203 = vunpack.c.l.b16 %v187
    %v204 = vpack.c.b16 %v201, %v200
    %v205 = vpack.c.b16 %v203, %v202
    %v209 = vsel %vm109, %v195, 0
    %211 = vmatpush.bf16.msra.mxu0 0
    %212 = vmatpush.bf16.msra.mxu0 0
    %213 = vmatpush.bf16.msra.mxu0 0
    %214 = vmatpush.bf16.msra.mxu0 0
    %215 = vmatpush.bf16.msra.mxu0 0
    %216 = vmatpush.bf16.msra.mxu0 0
    %217 = vmatpush.bf16.msra.mxu0 %v205
    %218 = vmatpush.bf16.msra.mxu0 %v204
    %219 = vmatmul.bf16.gmra.mxu0 %v209
    %v220 = vpop.f32.mrf.mxu0
    %v221 = vadd.f32 %v191, %v220
    %v222 = vpop.f32.mrf.mxu0
    %v223 = vadd.f32 %v191, %v222
    %224 = vdwg.mxu0
    %v225 = vpack.c.bf16 %v223, %v221
    %227 = vrot.lane.b32.xlu0 %v225, 64
    %v228 = vpop.permute.xlu0 %227
    %229 = vrot.lane.b32.xlu0 %v225, 32
    %v230 = vpop.permute.xlu0 %229
    %v232 = vsel %vm109, %v228, 0
    %v235 = vsel %vm109, %v230, 0
    %237 = vmatpush.bf16.xpose.msra.mxu0 0
    %238 = vmatpush.bf16.xpose.msra.mxu0 0
    %239 = vmatpush.bf16.xpose.msra.mxu0 0
    %240 = vmatpush.bf16.xpose.msra.mxu0 0
    %241 = vmatpush.bf16.xpose.msra.mxu0 0
    %242 = vmatpush.bf16.xpose.msra.mxu0 0
    %243 = vmatpush.bf16.xpose.msra.mxu0 0
    %244 = vmatpush.bf16.xpose.msra.mxu0 %v235
    %245 = vmatmul.bf16.gmra.mxu0 %v232
    %v246 = vpop.f32.mrf.mxu0
    %v247 = vadd.f32 %v54, %v246
    %v248 = vpop.f32.mrf.mxu0
    %v249 = vadd.f32 %v55, %v248
    %250 = vdwg.mxu0
    %v251 = vsel %vm56, %v247, -inf
    %252 = vmax.xlane.f32.xlu0 %v251
    %v253 = vpop.xlane.xlu0 %252
    %v254 = vsel %vm56, %v249, -inf
    %255 = vmax.xlane.f32.xlu0 %v254
    %v256 = vpop.xlane.xlu0 %255
    %v257 = vsub.f32 %v247, %v253
    %v258 = vsub.f32 %v249, %v256
    %v259 = vmul.f32 %v257, 1.442695
    %v260 = vpow.pop %v259
    %v261 = vmul.f32 %v258, 1.442695
    %v262 = vpow.pop %v261
    %v263 = vsel %vm56, %v260, 0.0
    %264 = vadd.xlane.f32.xlu0 %v263
    %v265 = vpop.xlane.xlu0 %264
    %v266 = vsel %vm56, %v262, 0.0
    %267 = vadd.xlane.f32.xlu0 %v266
    %v268 = vpop.xlane.xlu0 %267
    %v269 = vrcp.pop %v265
    %v270 = vrcp.pop %v268
    %v271 = vmul.f32 %v260, %v269
    %v272 = vmul.f32 %v262, %v270
    %v273 = vpack.c.bf16 %v272, %v271
    %v275 = vsel %vm56, %v273, 0
    %277 = vmatpush.bf16.msra.mxu0 0
    %278 = vmatpush.bf16.msra.mxu0 0
    %279 = vmatpush.bf16.msra.mxu0 0
    %280 = vmatpush.bf16.msra.mxu0 0
    %281 = vmatpush.bf16.msra.mxu0 0
    %282 = vmatpush.bf16.msra.mxu0 0
    %283 = vmatpush.bf16.msra.mxu0 0
    %284 = vmatpush.bf16.msra.mxu0 %v225
    %285 = vmatmul.bf16.gmra.mxu0 %v275
    %v286 = vpop.f32.mrf.mxu0
    %v287 = vadd.f32 0.0, %v286
    %v288 = vpop.f32.mrf.mxu0
    %v289 = vadd.f32 0.0, %v288
    %290 = vdwg.mxu0
    %v291 = vmul.f32 %v287, %v67
    %v292 = vmul.f32 %v289, %v68
    %295 = vrot.lane.b32.xlu0 %v291, 32
    %v296 = vpop.permute.xlu0 %295
    %297 = vrot.lane.b32.xlu0 %v292, 32
    %v298 = vpop.permute.xlu0 %297
    %v301 = vadd.f32 %v221, %v296
    %v302 = vadd.f32 %v223, %v298
    %v303 = vmax.f32 %v301, 0.0
    %v304 = vmax.f32 %v302, 0.0
    %v305 = vld [vmem:[#allocation2] sm:$0xff]
    %v306 = vld [vmem:[#allocation2 + $0x8] sm:$0xf]
    %v307 = vld [vmem:[#allocation2 + $0xc] sm:$0xff]
    %v308 = vld [vmem:[#allocation2 + $0x14] sm:$0xf]
    %v309 = vld [vmem:[#allocation2 + $0x18] sm:$0xff]
    %v310 = vld [vmem:[#allocation2 + $0x20] sm:$0xf]
    %v311 = vld [vmem:[#allocation2 + $0x24] sm:$0xff]
    %v312 = vld [vmem:[#allocation2 + $0x2c] sm:$0xf]
    %v313 = vld [vmem:[%s7] sm:$0x7]
    %v314 = vpack.c.bf16 %v304, %v303
    %v316 = vperm.slane %v313, 0
    %v317 = vperm.slane %v313, 1
    %v318 = vperm.slane %v313, 2
    %323 = vrot.lane.b32.xlu0 %v314, 96
    %v324 = vpop.permute.xlu0 %323
    %v333 = vunpack.c.l.b16 %v305
    %v334 = vunpack.c.h.b16 %v305
    %v335 = vunpack.c.l.b16 %v306
    %v336 = vunpack.c.l.b16 %v307
    %v337 = vunpack.c.h.b16 %v307
    %v338 = vunpack.c.l.b16 %v308
    %v339 = vunpack.c.l.b16 %v309
    %v340 = vunpack.c.h.b16 %v309
    %v341 = vunpack.c.l.b16 %v310
    %v342 = vunpack.c.l.b16 %v311
    %v343 = vunpack.c.h.b16 %v311
    %v344 = vunpack.c.l.b16 %v312
    %v345 = vpack.c.b16 %v336, %v333
    %v346 = vpack.c.b16 %v337, %v334
    %v347 = vpack.c.b16 %v338, %v335
    %v348 = vpack.c.b16 %v342, %v339
    %v349 = vpack.c.b16 %v343, %v340
    %v350 = vpack.c.b16 %v344, %v341
    %v358 = vsel %vm109, %v324, 0
    %360 = vmatpush.bf16.msra.mxu0 0
    %361 = vmatpush.bf16.msra.mxu0 0
    %362 = vmatpush.bf16.msra.mxu0 0
    %363 = vmatpush.bf16.msra.mxu0 0
    %364 = vmatpush.bf16.msra.mxu0 0
    %365 = vmatpush.bf16.msra.mxu0 0
    %366 = vmatpush.bf16.msra.mxu0 %v348
    %367 = vmatpush.bf16.msra.mxu0 %v345
    %368 = vmatmul.bf16.gmra.mxu0 %v358
    %v369 = vpop.f32.mrf.mxu0
    %v370 = vadd.f32 %v316, %v369
    %v371 = vpop.f32.mrf.mxu0
    %v372 = vadd.f32 %v316, %v371
    %373 = vdwg.mxu0
    %374 = vmatpush.bf16.msra.mxu0 0
    %375 = vmatpush.bf16.msra.mxu0 0
    %376 = vmatpush.bf16.msra.mxu0 0
    %377 = vmatpush.bf16.msra.mxu0 0
    %378 = vmatpush.bf16.msra.mxu0 0
    %379 = vmatpush.bf16.msra.mxu0 0
    %380 = vmatpush.bf16.msra.mxu0 %v349
    %381 = vmatpush.bf16.msra.mxu0 %v346
    %382 = vmatmul.bf16.gmra.mxu0 %v358
    %v383 = vpop.f32.mrf.mxu0
    %v384 = vadd.f32 %v317, %v383
    %v385 = vpop.f32.mrf.mxu0
    %v386 = vadd.f32 %v317, %v385
    %387 = vdwg.mxu0
    %388 = vmatpush.bf16.msra.mxu0 0
    %389 = vmatpush.bf16.msra.mxu0 0
    %390 = vmatpush.bf16.msra.mxu0 0
    %391 = vmatpush.bf16.msra.mxu0 0
    %392 = vmatpush.bf16.msra.mxu0 0
    %393 = vmatpush.bf16.msra.mxu0 0
    %394 = vmatpush.bf16.msra.mxu0 %v350
    %395 = vmatpush.bf16.msra.mxu0 %v347
    %396 = vmatmul.bf16.gmra.mxu0 %v358
    %v397 = vpop.f32.mrf.mxu0
    %v398 = vadd.f32 %v318, %v397
    %v399 = vpop.f32.mrf.mxu0
    %v400 = vadd.f32 %v318, %v399
    %401 = vdwg.mxu0
    %v402 = vpack.c.bf16 %v400, %v398
    %404 = vrot.lane.b32.xlu0 %v402, 120
    %v405 = vpop.permute.xlu0 %404
    %v407 = vsel %vm81, %v402, 0
    %v410 = vsel %vm81, %v405, 0
    %412 = vmatpush.bf16.xpose.msra.mxu0 0
    %413 = vmatpush.bf16.xpose.msra.mxu0 0
    %414 = vmatpush.bf16.xpose.msra.mxu0 0
    %415 = vmatpush.bf16.xpose.msra.mxu0 0
    %416 = vmatpush.bf16.xpose.msra.mxu0 0
    %417 = vmatpush.bf16.xpose.msra.mxu0 0
    %418 = vmatpush.bf16.xpose.msra.mxu0 0
    %419 = vmatpush.bf16.xpose.msra.mxu0 %v410
    %420 = vmatmul.bf16.gmra.mxu0 %v407
    %v421 = vpop.f32.mrf.mxu0
    %v422 = vadd.f32 %v54, %v421
    %v423 = vpop.f32.mrf.mxu0
    %v424 = vadd.f32 %v55, %v423
    %425 = vdwg.mxu0
    %v426 = vsel %vm56, %v422, -inf
    %427 = vmax.xlane.f32.xlu0 %v426
    %v428 = vpop.xlane.xlu0 %427
    %v429 = vsel %vm56, %v424, -inf
    %430 = vmax.xlane.f32.xlu0 %v429
    %v431 = vpop.xlane.xlu0 %430
    %v432 = vsub.f32 %v422, %v428
    %v433 = vsub.f32 %v424, %v431
    %v434 = vmul.f32 %v432, 1.442695
    %v435 = vpow.pop %v434
    %v436 = vmul.f32 %v433, 1.442695
    %v437 = vpow.pop %v436
    %v438 = vsel %vm56, %v435, 0.0
    %439 = vadd.xlane.f32.xlu0 %v438
    %v440 = vpop.xlane.xlu0 %439
    %v441 = vsel %vm56, %v437, 0.0
    %442 = vadd.xlane.f32.xlu0 %v441
    %v443 = vpop.xlane.xlu0 %442
    %v444 = vrcp.pop %v440
    %v445 = vrcp.pop %v443
    %v446 = vmul.f32 %v435, %v444
    %v447 = vmul.f32 %v437, %v445
    %v448 = vpack.c.bf16 %v447, %v446
    %v449 = vpack.c.bf16 %v372, %v370
    %v451 = vsel %vm56, %v448, 0
    %453 = vmatpush.bf16.msra.mxu0 0
    %454 = vmatpush.bf16.msra.mxu0 0
    %455 = vmatpush.bf16.msra.mxu0 0
    %456 = vmatpush.bf16.msra.mxu0 0
    %457 = vmatpush.bf16.msra.mxu0 0
    %458 = vmatpush.bf16.msra.mxu0 0
    %459 = vmatpush.bf16.msra.mxu0 0
    %460 = vmatpush.bf16.msra.mxu0 %v449
    %461 = vmatmul.bf16.gmra.mxu0 %v451
    %v462 = vpop.f32.mrf.mxu0
    %v463 = vadd.f32 0.0, %v462
    %v464 = vpop.f32.mrf.mxu0
    %v465 = vadd.f32 0.0, %v464
    %466 = vdwg.mxu0
    %v467 = vmul.f32 %v463, %v67
    %v468 = vmul.f32 %v465, %v68
    %v469 = vadd.f32 %v384, %v467
    %v470 = vadd.f32 %v386, %v468
    %v471 = vlaneseq
    %v472 = vand.u32 %v471, 127
    %vm473 = vcmp.lt.s32.totalorder %v472, 8
    %v474 = vsel %vm473, %v469, -1e+30
    %v475 = vsel %vm473, %v470, -1e+30
    %476 = vmax.xlane.f32.xlu0 %v474
    %v477 = vpop.xlane.xlu0 %476
    %478 = vmax.xlane.f32.xlu0 %v475
    %v479 = vpop.xlane.xlu0 %478
    %v480 = vsub.f32 %v469, %v477
    %v481 = vsub.f32 %v470, %v479
    %v482 = vsel %vm473, %v480, -1e+30
    %v483 = vsel %vm473, %v481, -1e+30
    %v484 = vmul.f32 %v482, 1.442695
    %v485 = vpow.pop %v484
    %v486 = vmul.f32 %v483, 1.442695
    %v487 = vpow.pop %v486
    %488 = vadd.xlane.f32.xlu0 %v485
    %v489 = vpop.xlane.xlu0 %488
    %490 = vadd.xlane.f32.xlu0 %v487
    %v491 = vpop.xlane.xlu0 %490
    %v492 = vlog2.pop %v489
    %v493 = vmul.f32 %v492, 0.6931472
    %v494 = vlog2.pop %v491
    %v495 = vmul.f32 %v494, 0.6931472
    %v496 = vsub.f32 %v480, %v493
    %v497 = vsub.f32 %v481, %v495
    %v498 = vsel %vm473, %v496, 0.0
    %v499 = vsel %vm473, %v497, 0.0
    %500 = vst [vmem:[%s8] sm:$0xff] %v498
    %501 = vst [vmem:[%s8 + $0x8] sm:$0xff] %v499
    // Predicated region
    $region38: #{graph_transformer_forward.1} parent=1 // pred_check
      _
    $region39: #{graph_transformer_forward.1} parent=1 // pred_check_branch
      %503 = sbr.rel (0) target = $region41
    $region40: #{graph_transformer_forward.1} parent=1 // pred_region
      _
    $region41: #{graph_transformer_forward.1} parent=1 // pred_fallthru
      _
    // Predicated region
    $region42: #{graph_transformer_forward.1} parent=1 // pred_check
      _
    $region43: #{graph_transformer_forward.1} parent=1 // pred_check_branch
      %505 = sbr.rel (0) target = $region45
    $region44: #{graph_transformer_forward.1} parent=1 // pred_region
      _
    $region45: #{graph_transformer_forward.1} parent=1 // pred_fallthru
      _
    %506 = vsyncpa [#allocation3], 1

</llo_original>
